<compile_context>
chip_gen: v7x
topology: tpu7x:2x2x1
jax: 0.10.0
libtpu: 0.0.40
codegen_flags: <defaults>
</compile_context>

<pallas_src>
import functools

import jax
import jax.numpy as jnp
from jax.experimental import pallas as pl
from jax.experimental.pallas import tpu as pltpu


HIDDEN = 256   # fixed by the module definition


def _round_up(n, m):
    return -(-n // m) * m


def _pick_block_m(B, C, block_m):
    """Pick the batch-tile size.

    - B > block_m: use block_m.
    - 32 <= B <= block_m: split into >=2 grid steps so v7x's two TensorCores
      both get a tile (costs one extra ~0.35us step on v5e/v6e: negligible).
    - tiny B: one sublane/packing-aligned tile (multiple of 16).
    Then shrink so the estimated per-step VMEM footprint stays under ~12 MiB
    (fits v5e's 16 MiB default scoped VMEM without flags).
    """
    if B > block_m:
        bm = block_m
    elif B >= 32:
        bm = _round_up(-(-B // 2), 16)
    else:
        bm = _round_up(B, 16)

    def footprint(m):
        x_tiles = 2 * m * C * 4                 # double-buffered f32 x tile
        o_tiles = 2 * m * HIDDEN * 4            # double-buffered out tile (worst case f32)
        interm = m * HIDDEN * (4 + 4 + 2)       # h f32, y f32, h bf16 temporaries
        weights = (C + HIDDEN) * HIDDEN * 2 + 2 * HIDDEN * 4
        return x_tiles + o_tiles + interm + weights

    while bm > 256 and footprint(bm) > 12 * 1024 * 1024:
        bm //= 2
    return bm


def _dqn_base_kernel(x_ref, w1_ref, b1_ref, w2_ref, b2_ref, o_ref):
    # x_ref:  (bm, C)        f32 input tile (cast to bf16 in-kernel)
    # w1_ref: (C, 256)       bf16 first linear weight (in x out), resident
    # b1_ref: (1, 256)       f32 first bias
    # w2_ref: (256, 256)     bf16 second linear weight, resident
    # b2_ref: (1, 256)       f32 second bias
    # o_ref:  (bm, 256)      bf16 (default) output tile
    x = x_ref[...].astype(jnp.bfloat16)
    h = jnp.dot(x, w1_ref[...], preferred_element_type=jnp.float32)
    h = jnp.maximum(h + b1_ref[...], 0.0)
    y = jnp.dot(h.astype(jnp.bfloat16), w2_ref[...],
                preferred_element_type=jnp.float32)
    o_ref[...] = jnp.maximum(y + b2_ref[...], 0.0).astype(o_ref.dtype)


@functools.partial(jax.jit, static_argnames=("block_m", "out_dtype"))
def dqn_base_forward(x, w1, b1, w2, b2, *, block_m=2048, out_dtype=jnp.bfloat16):
    """Forward pass of DQNBase.

    x:  (B, num_channels)  float (read as-is; cast to bf16 inside the kernel)
    w1: (num_channels, 256), b1: (1, 256) or (256,)
    w2: (256, 256),          b2: (1, 256) or (256,)
    returns (B, 256) in `out_dtype` (bf16 default; pass jnp.float32 for parity)
    """
    B, C = x.shape
    bm = _pick_block_m(B, C, block_m)
    grid_m = pl.cdiv(B, bm)

    w1b = w1.astype(jnp.bfloat16)
    w2b = w2.astype(jnp.bfloat16)
    b1f = b1.astype(jnp.float32).reshape(1, HIDDEN)
    b2f = b2.astype(jnp.float32).reshape(1, HIDDEN)

    out_bytes = jnp.dtype(out_dtype).itemsize
    cost = pl.CostEstimate(
        flops=2 * B * (C * HIDDEN + HIDDEN * HIDDEN),
        transcendentals=0,
        bytes_accessed=(B * C * x.dtype.itemsize              # x read
                        + (C + HIDDEN) * HIDDEN * 2           # bf16 weights
                        + 2 * HIDDEN * 4                      # f32 biases
                        + B * HIDDEN * out_bytes),            # output write
    )

    return pl.pallas_call(
        _dqn_base_kernel,
        out_shape=jax.ShapeDtypeStruct((B, HIDDEN), out_dtype),
        grid_spec=pltpu.PrefetchScalarGridSpec(
            num_scalar_prefetch=0,
            grid=(grid_m,),
            in_specs=[
                pl.BlockSpec((bm, C), lambda i: (i, 0)),           # x tile
                pl.BlockSpec((C, HIDDEN), lambda i: (0, 0)),       # w1 (resident)
                pl.BlockSpec((1, HIDDEN), lambda i: (0, 0)),       # b1
                pl.BlockSpec((HIDDEN, HIDDEN), lambda i: (0, 0)),  # w2 (resident)
                pl.BlockSpec((1, HIDDEN), lambda i: (0, 0)),       # b2
            ],
            out_specs=pl.BlockSpec((bm, HIDDEN), lambda i: (i, 0)),
        ),
        compiler_params=pltpu.CompilerParams(
            dimension_semantics=("parallel",),
        ),
        cost_estimate=cost,
    )(x, w1b, b1f, w2b, b2f)


def init_dqn_base_params(key, num_channels):
    """He (kaiming_uniform) init matching initialize_weights_he.

    PyTorch kaiming_uniform_ default: a=0, fan_in mode -> bound = sqrt(6/fan_in)
    (with the default sqrt(5) nonlinearity arg omitted as in the module's apply).
    Biases are zero.  Weights stored as (in, out) bf16 so the kernel does x @ W
    directly on the MXU; biases kept in f32.
    """
    k1, k2 = jax.random.split(key)

    bound1 = jnp.sqrt(6.0 / num_channels)
    w1 = jax.random.uniform(k1, (num_channels, HIDDEN), jnp.float32,
                            minval=-bound1, maxval=bound1).astype(jnp.bfloat16)
    b1 = jnp.zeros((1, HIDDEN), jnp.float32)

    bound2 = jnp.sqrt(6.0 / HIDDEN)
    w2 = jax.random.uniform(k2, (HIDDEN, HIDDEN), jnp.float32,
                            minval=-bound2, maxval=bound2).astype(jnp.bfloat16)
    b2 = jnp.zeros((1, HIDDEN), jnp.float32)

    return w1, b1, w2, b2


if __name__ == "__main__":
    key = jax.random.PRNGKey(0)
    k_params, k_x = jax.random.split(key)

    num_channels = 32   # state feature dim
    batch = 6           # not a multiple of 8 -> exercises the ragged-block path

    w1, b1, w2, b2 = init_dqn_base_params(k_params, num_channels)
    x = jax.random.normal(k_x, (batch, num_channels), jnp.float32)

    out = dqn_base_forward(x, w1, b1, w2, b2)
    out = jax.block_until_ready(out)

    # Pure-JAX reference with the same bf16-operand / f32-accumulate semantics.
    xb = x.astype(jnp.bfloat16)
    h_ref = jnp.maximum(
        jnp.dot(xb, w1, preferred_element_type=jnp.float32) + b1, 0.0)
    ref = jnp.maximum(
        jnp.dot(h_ref.astype(jnp.bfloat16), w2,
                preferred_element_type=jnp.float32) + b2, 0.0)

    assert out.shape == (batch, HIDDEN)
    assert jnp.allclose(out.astype(jnp.float32), ref, atol=2e-2, rtol=2e-2)

    print("KERNEL_OK")
</pallas_src>

<mosaic_0001>
module attributes {stable_mosaic.version = 11 : i64} {
  func.func @_dqn_base_kernel(%arg0: i32, %arg1: memref<16x32xf32, #tpu.memory_space<vmem>>, %arg2: memref<32x256xbf16, #tpu.memory_space<vmem>>, %arg3: memref<1x256xf32, #tpu.memory_space<vmem>>, %arg4: memref<256x256xbf16, #tpu.memory_space<vmem>>, %arg5: memref<1x256xf32, #tpu.memory_space<vmem>>, %arg6: memref<16x256xbf16, #tpu.memory_space<vmem>>) attributes {dimension_semantics = [#tpu.dimension_semantics<parallel>], iteration_bounds = array<i64: 1>, scalar_prefetch = 0 : i64, scratch_operands = 0 : i64, tpu.core_type = #tpu.core_type<tc>, window_params = [{transform_indices = @transform_0, window_bounds = array<i64: 16, 32>}, {pipeline_mode = #tpu.pipeline_mode<synchronous>, transform_indices = @transform_1, window_bounds = array<i64: 32, 256>}, {pipeline_mode = #tpu.pipeline_mode<synchronous>, transform_indices = @transform_2, window_bounds = array<i64: 1, 256>}, {pipeline_mode = #tpu.pipeline_mode<synchronous>, transform_indices = @transform_3, window_bounds = array<i64: 256, 256>}, {pipeline_mode = #tpu.pipeline_mode<synchronous>, transform_indices = @transform_4, window_bounds = array<i64: 1, 256>}, {transform_indices = @transform_5, window_bounds = array<i64: 16, 256>}]} {
    %c0 = arith.constant 0 : index
    %c0_0 = arith.constant 0 : index
    %0 = vector.load %arg1[%c0, %c0_0] : memref<16x32xf32, #tpu.memory_space<vmem>>, vector<16x32xf32>
    %1 = arith.truncf %0 : vector<16x32xf32> to vector<16x32xbf16>
    %c0_1 = arith.constant 0 : index
    %c0_2 = arith.constant 0 : index
    %2 = vector.load %arg2[%c0_1, %c0_2] : memref<32x256xbf16, #tpu.memory_space<vmem>>, vector<32x256xbf16>
    %cst = arith.constant dense<0.000000e+00> : vector<16x256xf32>
    %3 = tpu.matmul %1, %2, %cst {dimension_numbers = #tpu.dot_dimension_numbers<[1], [0], [0], [1], [0, 0, 1, 1], [], []>} : vector<16x32xbf16>, vector<32x256xbf16>, vector<16x256xf32> -> vector<16x256xf32>
    %c0_3 = arith.constant 0 : index
    %c0_4 = arith.constant 0 : index
    %4 = vector.load %arg3[%c0_3, %c0_4] : memref<1x256xf32, #tpu.memory_space<vmem>>, vector<1x256xf32>
    %5 = vector.broadcast %4 : vector<1x256xf32> to vector<16x256xf32>
    %6 = arith.addf %3, %5 : vector<16x256xf32>
    %cst_5 = arith.constant 0.000000e+00 : f32
    %7 = vector.broadcast %cst_5 : f32 to vector<16x256xf32>
    %8 = arith.maximumf %6, %7 : vector<16x256xf32>
    %9 = arith.truncf %8 : vector<16x256xf32> to vector<16x256xbf16>
    %c0_6 = arith.constant 0 : index
    %c0_7 = arith.constant 0 : index
    %10 = vector.load %arg4[%c0_6, %c0_7] : memref<256x256xbf16, #tpu.memory_space<vmem>>, vector<256x256xbf16>
    %cst_8 = arith.constant dense<0.000000e+00> : vector<16x256xf32>
    %11 = tpu.matmul %9, %10, %cst_8 {dimension_numbers = #tpu.dot_dimension_numbers<[1], [0], [0], [1], [0, 0, 1, 1], [], []>} : vector<16x256xbf16>, vector<256x256xbf16>, vector<16x256xf32> -> vector<16x256xf32>
    %c0_9 = arith.constant 0 : index
    %c0_10 = arith.constant 0 : index
    %12 = vector.load %arg5[%c0_9, %c0_10] : memref<1x256xf32, #tpu.memory_space<vmem>>, vector<1x256xf32>
    %13 = vector.broadcast %12 : vector<1x256xf32> to vector<16x256xf32>
    %14 = arith.addf %11, %13 : vector<16x256xf32>
    %cst_11 = arith.constant 0.000000e+00 : f32
    %15 = vector.broadcast %cst_11 : f32 to vector<16x256xf32>
    %16 = arith.maximumf %14, %15 : vector<16x256xf32>
    %17 = arith.truncf %16 : vector<16x256xf32> to vector<16x256xbf16>
    %c0_12 = arith.constant 0 : index
    %c0_13 = arith.constant 0 : index
    %18 = vector.load %arg6[%c0_12, %c0_13] : memref<16x256xbf16, #tpu.memory_space<vmem>>, vector<16x256xbf16>
    tpu.vector_store %arg6[%c0_12, %c0_13], %17 {strides = array<i32>} : memref<16x256xbf16, #tpu.memory_space<vmem>>, vector<16x256xbf16>,
    return
  }
  func.func @transform_0(%arg0: i32) -> (i32, i32) {
    %c0_i32 = arith.constant 0 : i32
    %c0_i32_0 = arith.constant 0 : i32
    return %arg0, %c0_i32 : i32, i32
  }
  func.func @transform_1(%arg0: i32) -> (i32, i32) {
    %c0_i32 = arith.constant 0 : i32
    %c0_i32_0 = arith.constant 0 : i32
    %c0_i32_1 = arith.constant 0 : i32
    return %c0_i32, %c0_i32_0 : i32, i32
  }
  func.func @transform_2(%arg0: i32) -> (i32, i32) {
    %c0_i32 = arith.constant 0 : i32
    %c0_i32_0 = arith.constant 0 : i32
    %c0_i32_1 = arith.constant 0 : i32
    return %c0_i32, %c0_i32_0 : i32, i32
  }
  func.func @transform_3(%arg0: i32) -> (i32, i32) {
    %c0_i32 = arith.constant 0 : i32
    %c0_i32_0 = arith.constant 0 : i32
    %c0_i32_1 = arith.constant 0 : i32
    return %c0_i32, %c0_i32_0 : i32, i32
  }
  func.func @transform_4(%arg0: i32) -> (i32, i32) {
    %c0_i32 = arith.constant 0 : i32
    %c0_i32_0 = arith.constant 0 : i32
    %c0_i32_1 = arith.constant 0 : i32
    return %c0_i32, %c0_i32_0 : i32, i32
  }
  func.func @transform_5(%arg0: i32) -> (i32, i32) {
    %c0_i32 = arith.constant 0 : i32
    %c0_i32_0 = arith.constant 0 : i32
    return %arg0, %c0_i32 : i32, i32
  }
}

</mosaic_0001>

<llo_original>
// kernel: dqn_base_forward.1
$region0: #{dqn_base_forward.1}
  #allocation0 [shape = 'u32[]', space=smem, size = 0x4, offset = 0x4, fixed_abs, tag = 'smem constant byte address 0x4 - core index']
  #allocation1 [shape = 'u32[144,128]{1,0:T(1,128)}', space=vmem, size = 0x12000, scoped, tag = 'internal scratch']
  %s0 = inlined_call_operand.hbm [shape: f32[6,32], index: 0, kind: input, shape index: {}]
  %s1 = inlined_call_operand.hbm [shape: bf16[32,256], index: 1, kind: input, shape index: {}]
  %s2 = inlined_call_operand.vmem [shape: f32[1,256], index: 2, kind: input, shape index: {}]
  %s3 = inlined_call_operand.hbm [shape: bf16[256,256], index: 3, kind: input, shape index: {}]
  %s4 = inlined_call_operand.vmem [shape: f32[1,256], index: 4, kind: input, shape index: {}]
  %s5 = inlined_call_operand.hbm [shape: bf16[6,256], index: 5, kind: output, shape index: {}]
  %s6 = sld [smem:[#allocation0]]
  $region42: #{dqn_base_forward.1} parent=0
    _
  %s8 = ssub.s32 1, %s6
  %s9 = scalar_select 0, %s8, %s6
  $region1: #{dqn_base_forward.1} parent=0
    #allocation2 [shape = 'u8[8192]{0}', space=vmem, size = 0x2000, scoped, tag = 'input window, operand 0, single buffered']
    #allocation3 [shape = 's32[1]{0}', space=sflag, size = 0x4, scoped, tag = 'scoped memory for dqn_base_forward.1']
    #allocation4 [shape = 's32[1]{0}', space=sflag, size = 0x4, scoped, tag = 'scoped memory for dqn_base_forward.1']
    #allocation5 [shape = 'u8[16384]{0}', space=vmem, size = 0x4000, scoped, tag = 'input window, operand 1, single buffered']
    #allocation6 [shape = 's32[1]{0}', space=sflag, size = 0x4, scoped, tag = 'scoped memory for dqn_base_forward.1']
    #allocation7 [shape = 'u8[131072]{0}', space=vmem, size = 0x20000, scoped, tag = 'input window, operand 3, single buffered']
    #allocation8 [shape = 'u8[8192]{0}', space=vmem, size = 0x2000, scoped, tag = 'output window, operand 0, single buffered']
    %10 = vsyncpa [#allocation3], 0
    %11 = vsyncpa [#allocation6], 0
    %12 = vsyncpa [#allocation4], 0
    // Predicated region
    $region2: #{dqn_base_forward.1} parent=1 // pred_check
      _
    $region3: #{dqn_base_forward.1} parent=1 // pred_check_branch
      %14 = sbr.rel (0) target = $region5
    $region4: #{dqn_base_forward.1} parent=1 // pred_region
      %s16 = ssub.s32 256, 128
      %17 = vsyncadd [#allocation3], %s16
      %s18 = sshll.u32 [#allocation2], 4
      %s19 = int_to_ptr.vmem [resolvable:$true] %s18
      %24 = dma.hbm_to_vmem [thread:$0]  %s0, 128, %s19, [#allocation3], 128, 128, 8
    $region5: #{dqn_base_forward.1} parent=1 // pred_fallthru
      _
    // Predicated region
    $region6: #{dqn_base_forward.1} parent=1 // pred_check
      _
    $region7: #{dqn_base_forward.1} parent=1 // pred_check_branch
      %26 = sbr.rel (0) target = $region9
    $region8: #{dqn_base_forward.1} parent=1 // pred_region
      %s28 = ssub.s32 512, 512
      %29 = vsyncadd [#allocation6], %s28
      %s30 = sshll.u32 [#allocation5], 4
      %s31 = int_to_ptr.vmem [resolvable:$true] %s30
      %36 = dma.hbm_to_vmem [thread:$0]  %s1, 512, %s31, [#allocation6], 128, 128, 8
    $region9: #{dqn_base_forward.1} parent=1 // pred_fallthru
      _
    // Predicated region
    $region10: #{dqn_base_forward.1} parent=1 // pred_check
      _
    $region11: #{dqn_base_forward.1} parent=1 // pred_check_branch
      %38 = sbr.rel (0) target = $region13
    $region12: #{dqn_base_forward.1} parent=1 // pred_region
      _
    $region13: #{dqn_base_forward.1} parent=1 // pred_fallthru
      _
    // Predicated region
    $region14: #{dqn_base_forward.1} parent=1 // pred_check
      _
    $region15: #{dqn_base_forward.1} parent=1 // pred_check_branch
      %40 = sbr.rel (0) target = $region17
    $region16: #{dqn_base_forward.1} parent=1 // pred_region
      %s42 = ssub.s32 4096, 4096
      %43 = vsyncadd [#allocation6], %s42
      %s44 = sshll.u32 [#allocation7], 4
      %s45 = int_to_ptr.vmem [resolvable:$true] %s44
      %50 = dma.hbm_to_vmem [thread:$0]  %s3, 4096, %s45, [#allocation6], 128, 128, 8
    $region17: #{dqn_base_forward.1} parent=1 // pred_fallthru
      _
    // Predicated region
    $region18: #{dqn_base_forward.1} parent=1 // pred_check
      _
    $region19: #{dqn_base_forward.1} parent=1 // pred_check_branch
      %52 = sbr.rel (0) target = $region21
    $region20: #{dqn_base_forward.1} parent=1 // pred_region
      _
    $region21: #{dqn_base_forward.1} parent=1 // pred_fallthru
      _
    // Predicated region
    $region22: #{dqn_base_forward.1} parent=1 // pred_check
      _
    $region23: #{dqn_base_forward.1} parent=1 // pred_check_branch
      %54 = sbr.rel (0) target = $region25
    $region24: #{dqn_base_forward.1} parent=1 // pred_region
      %55 = dma.done [#allocation3], 256
    $region25: #{dqn_base_forward.1} parent=1 // pred_fallthru
      _
    // Predicated region
    $region26: #{dqn_base_forward.1} parent=1 // pred_check
      _
    $region27: #{dqn_base_forward.1} parent=1 // pred_check_branch
      %57 = sbr.rel (0) target = $region29
    $region28: #{dqn_base_forward.1} parent=1 // pred_region
      %58 = dma.done [#allocation6], 512
    $region29: #{dqn_base_forward.1} parent=1 // pred_fallthru
      _
    // Predicated region
    $region30: #{dqn_base_forward.1} parent=1 // pred_check
      _
    $region31: #{dqn_base_forward.1} parent=1 // pred_check_branch
      %60 = sbr.rel (0) target = $region33
    $region32: #{dqn_base_forward.1} parent=1 // pred_region
      %61 = dma.done [#allocation6], 4096
    $region33: #{dqn_base_forward.1} parent=1 // pred_fallthru
      _
    %v63 = vld [vmem:[#allocation2] sm:$0xff]
    %v64 = vld [vmem:[#allocation2 + $0x8] sm:$0xff]
    %v65 = vpack.c.bf16 %v64, %v63
    %v66 = vld [vmem:[#allocation5] sm:$0xff]
    %v67 = vld [vmem:[#allocation5 + $0x8] sm:$0xff]
    %v68 = vld [vmem:[#allocation5 + $0x10] sm:$0xff]
    %v69 = vld [vmem:[#allocation5 + $0x18] sm:$0xff]
    %v70 = vld [vmem:[%s2] sm:$0x3]
    %v72 = vlaneseq
    %v73 = vshrl.u32 %v72, 7
    %v74 = vsub.s32 0, %v73
    %v75 = vrot.slane %v70, %v74
    %v76 = vlaneseq
    %v77 = vshrl.u32 %v76, 7
    %v78 = vsub.s32 1, %v77
    %v79 = vrot.slane %v70, %v78
    %v86 = vunpack.c.l.b16 %v66
    %v87 = vunpack.c.h.b16 %v66
    %v88 = vunpack.c.l.b16 %v67
    %v89 = vunpack.c.h.b16 %v67
    %v90 = vunpack.c.l.b16 %v68
    %v91 = vunpack.c.h.b16 %v68
    %v92 = vunpack.c.l.b16 %v69
    %v93 = vunpack.c.h.b16 %v69
    %v94 = vpack.c.b16 %v88, %v86
    %v95 = vpack.c.b16 %v89, %v87
    %v96 = vpack.c.b16 %v92, %v90
    %v97 = vpack.c.b16 %v93, %v91
    %vm102 = vcmask 261120
    %v104 = vsel %vm102, %v65, 0
    %106 = vmatprep.subr.bf16.mxu0 %v95
    %107 = vmatpush1.bf16.msra.mxu0 %v94
    %108 = vmatprep.subr.bf16.mxu0 %v97
    %109 = vmatpush1.bf16.msra.mxu0 %v96
    %110 = vmatprep.subr.bf16.mxu0 0
    %111 = vmatpush1.bf16.msra.mxu0 0
    %112 = vmatprep.subr.bf16.mxu0 0
    %113 = vmatpush1.bf16.msra.mxu0 0
    %114 = vmatprep.subr.bf16.mxu0 0
    %115 = vmatpush1.bf16.msra.mxu0 0
    %116 = vmatprep.subr.bf16.mxu0 0
    %117 = vmatpush1.bf16.msra.mxu0 0
    %118 = vmatprep.subr.bf16.mxu0 0
    %119 = vmatpush1.bf16.msra.mxu0 0
    %120 = vmatprep.subr.bf16.mxu0 0
    %121 = vmatpush1.bf16.msra.mxu0 0
    %122 = vmatprep.subr.bf16.mxu0 0
    %123 = vmatpush1.bf16.msra.mxu0 0
    %124 = vmatprep.subr.bf16.mxu0 0
    %125 = vmatpush1.bf16.msra.mxu0 0
    %126 = vmatprep.subr.bf16.mxu0 0
    %127 = vmatpush1.bf16.msra.mxu0 0
    %128 = vmatprep.subr.bf16.mxu0 0
    %129 = vmatpush1.bf16.msra.mxu0 0
    %130 = vmatprep.subr.bf16.mxu0 0
    %131 = vmatpush1.bf16.msra.mxu0 0
    %132 = vmatprep.subr.bf16.mxu0 0
    %133 = vmatpush1.bf16.msra.mxu0 0
    %134 = vmatprep.subr.bf16.mxu0 0
    %135 = vmatpush1.bf16.msra.mxu0 0
    %136 = vmatprep.subr.bf16.mxu0 0
    %137 = vmatpush1.bf16.msra.mxu0 0
    %138 = vmatprep.mubr.bf16.mxu0 0
    %139 = vmatmul.mubr.bf16.gmra.mrb[0].mxu0 %v104
    %v140 = vpop.f32.mrb[0].mxu0
    %v141 = vadd.f32 %v75, %v140
    %v142 = vpop.f32.mrb[0].mxu0
    %v143 = vadd.f32 %v79, %v142
    %v144 = vpop.f32.mrb[0].mxu0
    %v145 = vadd.f32 %v75, %v144
    %v146 = vpop.f32.mrb[0].mxu0
    %v147 = vadd.f32 %v79, %v146
    %148 = vdwg.mxu0
    %v149 = vmax.f32 %v141, 0.0
    %v150 = vmax.f32 %v143, 0.0
    %v151 = vmax.f32 %v145, 0.0
    %v152 = vmax.f32 %v147, 0.0
    %v153 = vpack.c.bf16 %v151, %v149
    %v154 = vpack.c.bf16 %v152, %v150
    %v155 = vld [vmem:[#allocation7] sm:$0xff]
    %v156 = vld [vmem:[#allocation7 + $0x8] sm:$0xff]
    %v157 = vld [vmem:[#allocation7 + $0x10] sm:$0xff]
    %v158 = vld [vmem:[#allocation7 + $0x18] sm:$0xff]
    %v159 = vld [vmem:[#allocation7 + $0x20] sm:$0xff]
    %v160 = vld [vmem:[#allocation7 + $0x28] sm:$0xff]
    %v161 = vld [vmem:[#allocation7 + $0x30] sm:$0xff]
    %v162 = vld [vmem:[#allocation7 + $0x38] sm:$0xff]
    %v163 = vld [vmem:[#allocation7 + $0x40] sm:$0xff]
    %v164 = vld [vmem:[#allocation7 + $0x48] sm:$0xff]
    %v165 = vld [vmem:[#allocation7 + $0x50] sm:$0xff]
    %v166 = vld [vmem:[#allocation7 + $0x58] sm:$0xff]
    %v167 = vld [vmem:[#allocation7 + $0x60] sm:$0xff]
    %v168 = vld [vmem:[#allocation7 + $0x68] sm:$0xff]
    %v169 = vld [vmem:[#allocation7 + $0x70] sm:$0xff]
    %v170 = vld [vmem:[#allocation7 + $0x78] sm:$0xff]
    %v171 = vld [vmem:[#allocation7 + $0x80] sm:$0xff]
    %v172 = vld [vmem:[#allocation7 + $0x88] sm:$0xff]
    %v173 = vld [vmem:[#allocation7 + $0x90] sm:$0xff]
    %v174 = vld [vmem:[#allocation7 + $0x98] sm:$0xff]
    %v175 = vld [vmem:[#allocation7 + $0xa0] sm:$0xff]
    %v176 = vld [vmem:[#allocation7 + $0xa8] sm:$0xff]
    %v177 = vld [vmem:[#allocation7 + $0xb0] sm:$0xff]
    %v178 = vld [vmem:[#allocation7 + $0xb8] sm:$0xff]
    %v179 = vld [vmem:[#allocation7 + $0xc0] sm:$0xff]
    %v180 = vld [vmem:[#allocation7 + $0xc8] sm:$0xff]
    %v181 = vld [vmem:[#allocation7 + $0xd0] sm:$0xff]
    %v182 = vld [vmem:[#allocation7 + $0xd8] sm:$0xff]
    %v183 = vld [vmem:[#allocation7 + $0xe0] sm:$0xff]
    %v184 = vld [vmem:[#allocation7 + $0xe8] sm:$0xff]
    %v185 = vld [vmem:[#allocation7 + $0xf0] sm:$0xff]
    %v186 = vld [vmem:[#allocation7 + $0xf8] sm:$0xff]
    %v187 = vld [vmem:[%s4] sm:$0x3]
    %v189 = vlaneseq
    %v190 = vshrl.u32 %v189, 7
    %v191 = vsub.s32 0, %v190
    %v192 = vrot.slane %v187, %v191
    %v193 = vlaneseq
    %v194 = vshrl.u32 %v193, 7
    %v195 = vsub.s32 1, %v194
    %v196 = vrot.slane %v187, %v195
    %v231 = vunpack.c.l.b16 %v155
    %v232 = vunpack.c.h.b16 %v155
    %v233 = vunpack.c.l.b16 %v156
    %v234 = vunpack.c.h.b16 %v156
    %v235 = vunpack.c.l.b16 %v157
    %v236 = vunpack.c.h.b16 %v157
    %v237 = vunpack.c.l.b16 %v158
    %v238 = vunpack.c.h.b16 %v158
    %v239 = vunpack.c.l.b16 %v159
    %v240 = vunpack.c.h.b16 %v159
    %v241 = vunpack.c.l.b16 %v160
    %v242 = vunpack.c.h.b16 %v160
    %v243 = vunpack.c.l.b16 %v161
    %v244 = vunpack.c.h.b16 %v161
    %v245 = vunpack.c.l.b16 %v162
    %v246 = vunpack.c.h.b16 %v162
    %v247 = vunpack.c.l.b16 %v163
    %v248 = vunpack.c.h.b16 %v163
    %v249 = vunpack.c.l.b16 %v164
    %v250 = vunpack.c.h.b16 %v164
    %v251 = vunpack.c.l.b16 %v165
    %v252 = vunpack.c.h.b16 %v165
    %v253 = vunpack.c.l.b16 %v166
    %v254 = vunpack.c.h.b16 %v166
    %v255 = vunpack.c.l.b16 %v167
    %v256 = vunpack.c.h.b16 %v167
    %v257 = vunpack.c.l.b16 %v168
    %v258 = vunpack.c.h.b16 %v168
    %v259 = vunpack.c.l.b16 %v169
    %v260 = vunpack.c.h.b16 %v169
    %v261 = vunpack.c.l.b16 %v170
    %v262 = vunpack.c.h.b16 %v170
    %v263 = vunpack.c.l.b16 %v171
    %v264 = vunpack.c.h.b16 %v171
    %v265 = vunpack.c.l.b16 %v172
    %v266 = vunpack.c.h.b16 %v172
    %v267 = vunpack.c.l.b16 %v173
    %v268 = vunpack.c.h.b16 %v173
    %v269 = vunpack.c.l.b16 %v174
    %v270 = vunpack.c.h.b16 %v174
    %v271 = vunpack.c.l.b16 %v175
    %v272 = vunpack.c.h.b16 %v175
    %v273 = vunpack.c.l.b16 %v176
    %v274 = vunpack.c.h.b16 %v176
    %v275 = vunpack.c.l.b16 %v177
    %v276 = vunpack.c.h.b16 %v177
    %v277 = vunpack.c.l.b16 %v178
    %v278 = vunpack.c.h.b16 %v178
    %v279 = vunpack.c.l.b16 %v179
    %v280 = vunpack.c.h.b16 %v179
    %v281 = vunpack.c.l.b16 %v180
    %v282 = vunpack.c.h.b16 %v180
    %v283 = vunpack.c.l.b16 %v181
    %v284 = vunpack.c.h.b16 %v181
    %v285 = vunpack.c.l.b16 %v182
    %v286 = vunpack.c.h.b16 %v182
    %v287 = vunpack.c.l.b16 %v183
    %v288 = vunpack.c.h.b16 %v183
    %v289 = vunpack.c.l.b16 %v184
    %v290 = vunpack.c.h.b16 %v184
    %v291 = vunpack.c.l.b16 %v185
    %v292 = vunpack.c.h.b16 %v185
    %v293 = vunpack.c.l.b16 %v186
    %v294 = vunpack.c.h.b16 %v186
    %v295 = vpack.c.b16 %v233, %v231
    %v296 = vpack.c.b16 %v234, %v232
    %v297 = vpack.c.b16 %v237, %v235
    %v298 = vpack.c.b16 %v238, %v236
    %v299 = vpack.c.b16 %v241, %v239
    %v300 = vpack.c.b16 %v242, %v240
    %v301 = vpack.c.b16 %v245, %v243
    %v302 = vpack.c.b16 %v246, %v244
    %v303 = vpack.c.b16 %v249, %v247
    %v304 = vpack.c.b16 %v250, %v248
    %v305 = vpack.c.b16 %v253, %v251
    %v306 = vpack.c.b16 %v254, %v252
    %v307 = vpack.c.b16 %v257, %v255
    %v308 = vpack.c.b16 %v258, %v256
    %v309 = vpack.c.b16 %v261, %v259
    %v310 = vpack.c.b16 %v262, %v260
    %v311 = vpack.c.b16 %v265, %v263
    %v312 = vpack.c.b16 %v266, %v264
    %v313 = vpack.c.b16 %v269, %v267
    %v314 = vpack.c.b16 %v270, %v268
    %v315 = vpack.c.b16 %v273, %v271
    %v316 = vpack.c.b16 %v274, %v272
    %v317 = vpack.c.b16 %v277, %v275
    %v318 = vpack.c.b16 %v278, %v276
    %v319 = vpack.c.b16 %v281, %v279
    %v320 = vpack.c.b16 %v282, %v280
    %v321 = vpack.c.b16 %v285, %v283
    %v322 = vpack.c.b16 %v286, %v284
    %v323 = vpack.c.b16 %v289, %v287
    %v324 = vpack.c.b16 %v290, %v288
    %v325 = vpack.c.b16 %v293, %v291
    %v326 = vpack.c.b16 %v294, %v292
    %359 = vmatprep.subr.bf16.mxu0 %v296
    %360 = vmatpush1.bf16.msra.mxu0 %v295
    %361 = vmatprep.subr.bf16.mxu0 %v298
    %362 = vmatpush1.bf16.msra.mxu0 %v297
    %363 = vmatprep.subr.bf16.mxu0 %v300
    %364 = vmatpush1.bf16.msra.mxu0 %v299
    %365 = vmatprep.subr.bf16.mxu0 %v302
    %366 = vmatpush1.bf16.msra.mxu0 %v301
    %367 = vmatprep.subr.bf16.mxu0 %v304
    %368 = vmatpush1.bf16.msra.mxu0 %v303
    %369 = vmatprep.subr.bf16.mxu0 %v306
    %370 = vmatpush1.bf16.msra.mxu0 %v305
    %371 = vmatprep.subr.bf16.mxu0 %v308
    %372 = vmatpush1.bf16.msra.mxu0 %v307
    %373 = vmatprep.subr.bf16.mxu0 %v310
    %374 = vmatpush1.bf16.msra.mxu0 %v309
    %375 = vmatprep.subr.bf16.mxu0 %v312
    %376 = vmatpush1.bf16.msra.mxu0 %v311
    %377 = vmatprep.subr.bf16.mxu0 %v314
    %378 = vmatpush1.bf16.msra.mxu0 %v313
    %379 = vmatprep.subr.bf16.mxu0 %v316
    %380 = vmatpush1.bf16.msra.mxu0 %v315
    %381 = vmatprep.subr.bf16.mxu0 %v318
    %382 = vmatpush1.bf16.msra.mxu0 %v317
    %383 = vmatprep.subr.bf16.mxu0 %v320
    %384 = vmatpush1.bf16.msra.mxu0 %v319
    %385 = vmatprep.subr.bf16.mxu0 %v322
    %386 = vmatpush1.bf16.msra.mxu0 %v321
    %387 = vmatprep.subr.bf16.mxu0 %v324
    %388 = vmatpush1.bf16.msra.mxu0 %v323
    %389 = vmatprep.subr.bf16.mxu0 %v326
    %390 = vmatpush1.bf16.msra.mxu0 %v325
    %391 = vmatprep.mubr.bf16.mxu0 %v154
    %392 = vmatmul.mubr.bf16.gmra.mrb[0].mxu0 %v153
    %v393 = vpop.f32.mrb[0].mxu0
    %v394 = vadd.f32 %v192, %v393
    %v395 = vpop.f32.mrb[0].mxu0
    %v396 = vadd.f32 %v196, %v395
    %v397 = vpop.f32.mrb[0].mxu0
    %v398 = vadd.f32 %v192, %v397
    %v399 = vpop.f32.mrb[0].mxu0
    %v400 = vadd.f32 %v196, %v399
    %401 = vdwg.mxu0
    %v402 = vmax.f32 %v394, 0.0
    %v403 = vmax.f32 %v396, 0.0
    %v404 = vmax.f32 %v398, 0.0
    %v405 = vmax.f32 %v400, 0.0
    %v406 = vpack.c.bf16 %v404, %v402
    %v407 = vpack.c.bf16 %v405, %v403
    %v410 = vunpack.c.l.b16 %v406
    %v411 = vunpack.c.l.b16 %v407
    %v412 = vunpack.c.h.b16 %v406
    %v413 = vunpack.c.h.b16 %v407
    %v414 = vpack.c.b16 %v411, %v410
    %v415 = vpack.c.b16 %v413, %v412
    %418 = vst [vmem:[#allocation8] sm:$0xff] %v414
    %419 = vst [vmem:[#allocation8 + $0x8] sm:$0xff] %v415
    // Predicated region
    $region34: #{dqn_base_forward.1} parent=1 // pred_check
      _
    $region35: #{dqn_base_forward.1} parent=1 // pred_check_branch
      %421 = sbr.rel (0) target = $region37
    $region36: #{dqn_base_forward.1} parent=1 // pred_region
      %s423 = ssub.s32 256, 128
      %424 = vsyncadd [#allocation4], %s423
      %s425 = sshll.u32 [#allocation8], 4
      %s426 = int_to_ptr.vmem [resolvable:$true] %s425
      %431 = dma.vmem_to_hbm [thread:$0]  %s426, 128, %s5, [#allocation4], 128, 128, 8
    $region37: #{dqn_base_forward.1} parent=1 // pred_fallthru
      _
    // Predicated region
    $region38: #{dqn_base_forward.1} parent=1 // pred_check
      _
    $region39: #{dqn_base_forward.1} parent=1 // pred_check_branch
      %433 = sbr.rel (0) target = $region41
    $region40: #{dqn_base_forward.1} parent=1 // pred_region
      %434 = dma.done [#allocation4], 256
    $region41: #{dqn_base_forward.1} parent=1 // pred_fallthru
      _
    %435 = vsyncpa [#allocation3], 1
    %436 = vsyncpa [#allocation6], 1
    %437 = vsyncpa [#allocation4], 1

</llo_original>
